<compile_context>
chip_gen: v5e
topology: v5e:2x2
jax: 0.10.0
libtpu: 0.0.40
codegen_flags: <defaults>
</compile_context>

<pallas_src>
import math

import jax
import jax.numpy as jnp
from jax.experimental import pallas as pl
from jax.experimental.pallas import tpu as pltpu


def _elementwise_linear_kernel(w_ref, x_ref, o_ref):
    # w_ref: (1, td) tile; x_ref / o_ref: (tb, td) tiles.
    # Broadcast multiply on the VPU (promotes to f32 if w is f32 and x is bf16),
    # then cast to the output dtype. HBM-bandwidth bound.
    o_ref[...] = (w_ref[...] * x_ref[...]).astype(o_ref.dtype)


def _sublane_multiple(dtype) -> int:
    # vreg tiling is (8, 128) in 32-bit units; narrower dtypes pack along sublanes.
    itemsize = jnp.dtype(dtype).itemsize
    return max(8, 32 // max(1, itemsize))  # 8 for f32, 16 for bf16, 32 for int8/fp8


_MAX_TILE_D = 16384  # lanes per feature tile when D is very wide


def _hw_profile():
    """Generation-dependent tiling targets (safe fallback if detection fails)."""
    kind = ""
    try:
        kind = jax.devices()[0].device_kind.lower()
    except Exception:
        pass
    if "v7" in kind:
        # 3.2 TB/s HBM, 64 MiB physical VMEM, 2 TensorCores.
        return dict(target_tile_bytes=8 << 20, prefer_even_grid=True,
                    min_steps=2, vmem_cap=48 << 20)
    if "v6" in kind:
        # ~1.4 TB/s HBM, 128 MiB physical VMEM, 1 TC.
        return dict(target_tile_bytes=6 << 20, prefer_even_grid=False,
                    min_steps=4, vmem_cap=64 << 20)
    if "v5" in kind:
        # ~0.8 TB/s HBM, 16 MiB scoped VMEM default -> keep tiles modest.
        return dict(target_tile_bytes=3 << 20, prefer_even_grid=False,
                    min_steps=4, vmem_cap=32 << 20)
    return dict(target_tile_bytes=4 << 20, prefer_even_grid=False,
                min_steps=4, vmem_cap=48 << 20)


def _choose_tile_d(D: int) -> int:
    """Full extent unless D is very wide; then the largest 128-multiple dividing D."""
    if D <= _MAX_TILE_D or D % 128 != 0:
        return D  # full-extent last dim is always layout-legal (covers D < 128)
    td = _MAX_TILE_D
    while td >= 128:
        if D % td == 0:
            return td
        td -= 128
    return _MAX_TILE_D


def _lane_dense_fold(B: int, D: int):
    """Find k > 1 with (D*k) % 128 == 0 and B % k == 0 (lane-dense reshape), else None."""
    if D % 128 == 0:
        return None
    k_min = 128 // math.gcd(D, 128)
    if k_min <= 1:
        return None
    k = k_min
    while k <= B and D * k <= _MAX_TILE_D:
        if B % k == 0:
            return k
        k += k_min
    return None


def _choose_block_b(B: int, tile_d: int, dtype, *, target_tile_bytes: int,
                    min_steps: int, prefer_even_grid: bool) -> int:
    """Sublane-aligned batch tile sized to the HBM byte target."""
    sub = _sublane_multiple(dtype)
    if B <= sub:
        return B  # full-extent block is always layout-legal
    itemsize = jnp.dtype(dtype).itemsize
    rows_by_bytes = max(sub, target_tile_bytes // max(1, tile_d * itemsize))
    block_b = min(B, rows_by_bytes)
    # Only shrink below the byte target when needed for a minimal step count
    # (>=2 for v7x megacore sharding, ~4 for single-TC DMA/compute overlap).
    if B >= min_steps * sub:
        block_b = min(block_b, pl.cdiv(B, min_steps))
    # Round down to the dtype sublane multiple (Mosaic (8,128) constraint).
    block_b = max(sub, (block_b // sub) * sub)
    block_b = min(block_b, B)
    if prefer_even_grid and block_b < B:
        # Keep the two v7x TensorCores balanced: nudge grid_b to an even count.
        grid_b = pl.cdiv(B, block_b)
        if grid_b % 2 == 1:
            cand = pl.cdiv(B, grid_b + 1)
            cand = max(sub, ((cand + sub - 1) // sub) * sub)  # round UP to sublane multiple
            if cand <= block_b:
                block_b = cand
    return block_b


def elementwise_linear(x, weight, activation=None, *, block_b=None, block_d=None):
    """f(weight) * x, f = identity or sigmoid.  x: (B, D), weight: (1, D)."""
    B, D = x.shape
    assert weight.shape == (1, D), f"weight must be (1, {D}), got {weight.shape}"

    # Apply the activation once to the tiny (1, D) weight. For sigmoid, keep
    # the weight in float32 (matches PyTorch multiplying f32 sigmoid(weight)
    # against x); the kernel multiply promotes and casts back to x.dtype.
    if activation is None:
        w_eff = weight.astype(x.dtype)
    elif activation == "sigmoid":
        w_eff = jax.nn.sigmoid(weight.astype(jnp.float32))
    else:
        raise ValueError(f"unsupported activation: {activation!r}")

    prof = _hw_profile()

    # Lane-dense fold for small / non-128-aligned D: avoids masked vst.msk
    # partial stores (biggest single lever for mem-bound kernels).
    fold_k = _lane_dense_fold(B, D) if (block_b is None and block_d is None) else None
    if fold_k is not None:
        x_run = x.reshape(B // fold_k, D * fold_k)
        w_run = jnp.tile(w_eff, (1, fold_k))
        Br, Dr = x_run.shape
    else:
        x_run, w_run = x, w_eff
        Br, Dr = B, D

    tile_d = _choose_tile_d(Dr) if block_d is None else block_d
    tile_b = (_choose_block_b(Br, tile_d, x.dtype,
                              target_tile_bytes=prof["target_tile_bytes"],
                              min_steps=prof["min_steps"],
                              prefer_even_grid=prof["prefer_even_grid"])
              if block_b is None else block_b)

    grid_b = pl.cdiv(Br, tile_b)
    grid_d = pl.cdiv(Dr, tile_d)

    if grid_d == 1:
        grid = (grid_b,)
        in_specs = [
            pl.BlockSpec((1, Dr), lambda i: (0, 0)),           # weight: same tile each step
            pl.BlockSpec((tile_b, Dr), lambda i: (i, 0)),      # x: tiled over batch
        ]
        out_specs = pl.BlockSpec((tile_b, Dr), lambda i: (i, 0))
        dim_sem = ("parallel",)
    else:
        # d outer, batch innermost: weight block index is constant along the
        # fast axis, so its re-fetch is skipped.
        grid = (grid_d, grid_b)
        in_specs = [
            pl.BlockSpec((1, tile_d), lambda j, i: (0, j)),
            pl.BlockSpec((tile_b, tile_d), lambda j, i: (i, j)),
        ]
        out_specs = pl.BlockSpec((tile_b, tile_d), lambda j, i: (i, j))
        dim_sem = ("parallel", "parallel")

    itemsize = jnp.dtype(x.dtype).itemsize
    w_itemsize = jnp.dtype(w_run.dtype).itemsize
    tile_bytes = tile_b * tile_d * itemsize
    # Double-buffered x + out tiles, plus double-buffered weight tile.
    footprint = 2 * (2 * tile_bytes) + 2 * tile_d * w_itemsize
    vmem_limit = int(min(prof["vmem_cap"], max(32 << 20, footprint + (8 << 20))))

    out = pl.pallas_call(
        _elementwise_linear_kernel,
        out_shape=jax.ShapeDtypeStruct((Br, Dr), x.dtype),
        grid_spec=pltpu.PrefetchScalarGridSpec(
            num_scalar_prefetch=0,
            grid=grid,
            in_specs=in_specs,
            out_specs=out_specs,
        ),
        compiler_params=pltpu.CompilerParams(
            dimension_semantics=dim_sem,
            vmem_limit_bytes=vmem_limit,
        ),
        cost_estimate=pl.CostEstimate(
            flops=B * D,
            transcendentals=0,
            bytes_accessed=2 * B * D * itemsize + D * w_itemsize,
        ),
    )(w_run, x_run)

    if fold_k is not None:
        out = out.reshape(B, D)
    return out


if __name__ == "__main__":
    key = jax.random.PRNGKey(0)

    # Small but pipeline-exercising shapes.
    B, D = 64, 128
    x = jax.random.normal(key, (B, D), dtype=jnp.float32)
    weight = jnp.ones((1, D), dtype=jnp.float32)  # reset_parameters(): ones

    # identity activation
    out_id = jax.block_until_ready(elementwise_linear(x, weight, activation=None))
    assert jnp.allclose(out_id, weight * x, atol=1e-6), "identity path mismatch"

    # sigmoid activation
    out_sig = jax.block_until_ready(elementwise_linear(x, weight, activation="sigmoid"))
    assert jnp.allclose(out_sig, jax.nn.sigmoid(weight) * x, atol=1e-6), "sigmoid path mismatch"

    # uneven batch (partial last tile) exercises masked writeback of the last block
    x2 = jax.random.normal(jax.random.PRNGKey(1), (20, D), dtype=jnp.float32)
    out2 = jax.block_until_ready(elementwise_linear(x2, weight, activation="sigmoid"))
    assert jnp.allclose(out2, jax.nn.sigmoid(weight) * x2, atol=1e-6), "uneven batch mismatch"

    # small non-128-aligned D exercises the lane-dense fold (32*4 -> 128 lanes)
    B3, D3 = 32, 32
    x3 = jax.random.normal(jax.random.PRNGKey(2), (B3, D3), dtype=jnp.float32)
    w3 = 1.0 + 0.1 * jax.random.normal(jax.random.PRNGKey(3), (1, D3), dtype=jnp.float32)
    out3 = jax.block_until_ready(elementwise_linear(x3, w3, activation="sigmoid"))
    assert jnp.allclose(out3, jax.nn.sigmoid(w3) * x3, atol=1e-6), "lane-dense fold mismatch"

    # bf16 input with sigmoid: weight stays f32, multiply in f32, cast to bf16
    x4 = jax.random.normal(jax.random.PRNGKey(4), (B, D), dtype=jnp.bfloat16)
    out4 = jax.block_until_ready(elementwise_linear(x4, weight, activation="sigmoid"))
    ref4 = (jax.nn.sigmoid(weight.astype(jnp.float32))
            * x4.astype(jnp.float32)).astype(jnp.bfloat16)
    assert jnp.allclose(out4.astype(jnp.float32), ref4.astype(jnp.float32),
                        atol=1e-2, rtol=1e-2), "bf16 sigmoid path mismatch"

    print("KERNEL_OK")
</pallas_src>

<mosaic_0001>
module attributes {stable_mosaic.version = 11 : i64} {
  func.func @_elementwise_linear_kernel(%arg0: i32, %arg1: memref<1x128xf32, #tpu.memory_space<vmem>>, %arg2: memref<16x128xf32, #tpu.memory_space<vmem>>, %arg3: memref<16x128xf32, #tpu.memory_space<vmem>>) attributes {dimension_semantics = [#tpu.dimension_semantics<parallel>], iteration_bounds = array<i64: 4>, scalar_prefetch = 0 : i64, scratch_operands = 0 : i64, tpu.core_type = #tpu.core_type<tc>, window_params = [{pipeline_mode = #tpu.pipeline_mode<synchronous>, transform_indices = @transform_0, window_bounds = array<i64: 1, 128>}, {transform_indices = @transform_1, window_bounds = array<i64: 16, 128>}, {transform_indices = @transform_2, window_bounds = array<i64: 16, 128>}]} {
    %c0 = arith.constant 0 : index
    %c0_0 = arith.constant 0 : index
    %0 = vector.load %arg1[%c0, %c0_0] : memref<1x128xf32, #tpu.memory_space<vmem>>, vector<1x128xf32>
    %c0_1 = arith.constant 0 : index
    %c0_2 = arith.constant 0 : index
    %1 = vector.load %arg2[%c0_1, %c0_2] : memref<16x128xf32, #tpu.memory_space<vmem>>, vector<16x128xf32>
    %2 = vector.broadcast %0 : vector<1x128xf32> to vector<16x128xf32>
    %3 = arith.mulf %2, %1 : vector<16x128xf32>
    %c0_3 = arith.constant 0 : index
    %c0_4 = arith.constant 0 : index
    %4 = vector.load %arg3[%c0_3, %c0_4] : memref<16x128xf32, #tpu.memory_space<vmem>>, vector<16x128xf32>
    tpu.vector_store %arg3[%c0_3, %c0_4], %3 {strides = array<i32>} : memref<16x128xf32, #tpu.memory_space<vmem>>, vector<16x128xf32>,
    return
  }
  func.func @transform_0(%arg0: i32) -> (i32, i32) {
    %c0_i32 = arith.constant 0 : i32
    %c0_i32_0 = arith.constant 0 : i32
    %c0_i32_1 = arith.constant 0 : i32
    return %c0_i32, %c0_i32_0 : i32, i32
  }
  func.func @transform_1(%arg0: i32) -> (i32, i32) {
    %c0_i32 = arith.constant 0 : i32
    %c0_i32_0 = arith.constant 0 : i32
    return %arg0, %c0_i32 : i32, i32
  }
  func.func @transform_2(%arg0: i32) -> (i32, i32) {
    %c0_i32 = arith.constant 0 : i32
    %c0_i32_0 = arith.constant 0 : i32
    return %arg0, %c0_i32 : i32, i32
  }
}

</mosaic_0001>

<llo_original>
// kernel: tpu_custom_call.1
$region0: #{tpu_custom_call.1}
  #allocation0 [shape = 'u32[]', space=smem, size = 0x4, offset = 0x4, fixed_abs, tag = 'smem constant byte address 0x4 - core index']
  #allocation1 [shape = 'u32[72,128]{1,0:T(1,128)}', space=vmem, size = 0x9000, scoped, tag = 'internal scratch']
  %s0 = inlined_call_operand.hbm [shape: f32[1,128], index: 0, kind: input, shape index: {}]
  %s1 = inlined_call_operand.hbm [shape: f32[64,128], index: 1, kind: input, shape index: {}]
  %s2 = inlined_call_operand.hbm [shape: f32[64,128], index: 2, kind: output, shape index: {}]
  %s3 = sld [smem:[#allocation0]]
  $region49: #{tpu_custom_call.1} parent=0
    _
  %s5 = ssub.s32 1, %s3
  %s6 = scalar_select 0, %s5, %s3
  $region1: #{tpu_custom_call.1} parent=0
    #allocation2 [shape = 'u8[512]{0}', space=vmem, size = 0x400, scoped, tag = 'input window, operand 0, single buffered']
    #allocation3 [shape = 's32[2]{0}', space=sflag, size = 0x8, scoped, tag = 'scoped memory for tpu_custom_call.1']
    #allocation4 [shape = 's32[2]{0}', space=sflag, size = 0x8, scoped, tag = 'scoped memory for tpu_custom_call.1']
    #allocation5 [shape = 'u8[16384]{0}', space=vmem, size = 0x4000, scoped, tag = 'input window, operand 1']
    #allocation6 [shape = 's32[2]{0}', space=sflag, size = 0x8, scoped, tag = 'scoped memory for tpu_custom_call.1']
    #allocation7 [shape = 'u8[16384]{0}', space=vmem, size = 0x4000, scoped, tag = 'output window, operand 0']
    %7 = vsyncpa [#allocation3], 0
    %8 = vsyncpa [#allocation6], 0
    %s9 = scalar_lea.sflag [#allocation6], 1
    %10 = vsyncpa %s9, 0
    %11 = vsyncpa [#allocation4], 0
    %s12 = scalar_lea.sflag [#allocation4], 1
    %13 = vsyncpa %s12, 0
    loop: start=0, step=1, limit=6
    $region2: #{tpu_custom_call.1} parent=1 // loop_pre_header
      _
    $region3: #{tpu_custom_call.1} parent=1 // loop_header
      %s15 = sphi 0, %s19
      %p16 = scmp.ge.s32.totalorder %s15, 6
      %s23 = sphi 0, %s23
      %s25 = sphi 0, %s23
      %s26 = sphi 0, %s25
      %s40 = sphi 0, %s26
      %s46 = sphi 0, %s48
      %s49 = sphi 0, %s46
      %s50 = sphi 0, %s49
      %s66 = sphi 0, %s50
      %s72 = sphi 0, %s74
      %s75 = sphi 0, %s72
      %s76 = sphi 0, %s75
      %s92 = sphi 0, %s76
    $region4: #{tpu_custom_call.1} parent=1 // loop_header_branch
      %18 = sbr.rel (%p16) target = $region8
    $region5: #{tpu_custom_call.1} parent=1 // loop_body
      %s20 = ssub.s32 %s15, 1
      %s21 = ssub.s32 %s15, 2
      %s22 = sadd.s32 %s15, 1
      %s24 = sadd.s32 %s23, 1
      %p27 = scmp.eq.s32.totalorder %s15, 3
      %p28 = scmp.ne.s32.totalorder %s23, %s25
      %p29 = scmp.eq.s32.totalorder %s15, 0
      %p30 = por %p28, %p29
      %p31 = scmp.ne.s32.totalorder %s23, %s25
      %p32 = scmp.eq.s32.totalorder %s20, 3
      %p33 = por %p31, %p32
      %p34 = scmp.ne.s32.totalorder %s25, %s26
      %p35 = scmp.eq.s32.totalorder %s20, 0
      %p36 = por %p34, %p35
      %p37 = scmp.ne.s32.totalorder %s25, %s26
      %p38 = scmp.eq.s32.totalorder %s21, 3
      %p39 = por %p37, %p38
      %p41 = scmp.ne.s32.totalorder %s26, %s40
      %p42 = scmp.eq.s32.totalorder %s21, 0
      %p43 = por %p41, %p42
      %s44 = ssub.s32 %s15, %s22
      %p45 = scmp.eq.s32.totalorder %s44, 0
      %s47 = sadd.s32 %s46, 1
      %s48 = scalar_select %p45, %s46, %s47
      %p51 = pneg %p45
      %p52 = scmp.eq.s32.totalorder %s15, 3
      %p53 = por %p51, %p52
      %p54 = scmp.ne.s32.totalorder %s46, %s49
      %p55 = scmp.eq.s32.totalorder %s15, 0
      %p56 = por %p54, %p55
      %p57 = scmp.ne.s32.totalorder %s46, %s49
      %p58 = scmp.eq.s32.totalorder %s20, 3
      %p59 = por %p57, %p58
      %p60 = scmp.ne.s32.totalorder %s49, %s50
      %p61 = scmp.eq.s32.totalorder %s20, 0
      %p62 = por %p60, %p61
      %p63 = scmp.ne.s32.totalorder %s49, %s50
      %p64 = scmp.eq.s32.totalorder %s21, 3
      %p65 = por %p63, %p64
      %p67 = scmp.ne.s32.totalorder %s50, %s66
      %p68 = scmp.eq.s32.totalorder %s21, 0
      %p69 = por %p67, %p68
      %s70 = ssub.s32 %s15, %s22
      %p71 = scmp.eq.s32.totalorder %s70, 0
      %s73 = sadd.s32 %s72, 1
      %s74 = scalar_select %p71, %s72, %s73
      %p77 = pneg %p71
      %p78 = scmp.eq.s32.totalorder %s15, 3
      %p79 = por %p77, %p78
      %p80 = scmp.ne.s32.totalorder %s72, %s75
      %p81 = scmp.eq.s32.totalorder %s15, 0
      %p82 = por %p80, %p81
      %p83 = scmp.ne.s32.totalorder %s72, %s75
      %p84 = scmp.eq.s32.totalorder %s20, 3
      %p85 = por %p83, %p84
      %p86 = scmp.ne.s32.totalorder %s75, %s76
      %p87 = scmp.eq.s32.totalorder %s20, 0
      %p88 = por %p86, %p87
      %p89 = scmp.ne.s32.totalorder %s75, %s76
      %p90 = scmp.eq.s32.totalorder %s21, 3
      %p91 = por %p89, %p90
      %p93 = scmp.ne.s32.totalorder %s76, %s92
      %p94 = scmp.eq.s32.totalorder %s21, 0
      %p95 = por %p93, %p94
      %p96 = scmp.le.s32.totalorder 1, %s15
      %p97 = scmp.lt.s32.totalorder %s15, 5
      %p98 = pnand %p96, %p97
      %p99 = pneg %p98
      // Predicated region
      $region9: #{tpu_custom_call.1} parent=5 // pred_check
        _
      $region10: #{tpu_custom_call.1} parent=5 // pred_check_branch
        %101 = sbr.rel (%p98) target = $region12
      $region11: #{tpu_custom_call.1} parent=5 // pred_region
        %s102 = ssub.s32 %s15, 1
        // Predicated region
        $region13: #{tpu_custom_call.1} parent=11 // pred_check
          %p103 = pneg %p36
        $region14: #{tpu_custom_call.1} parent=11 // pred_check_branch
          %105 = sbr.rel (%p103) target = $region16
        $region15: #{tpu_custom_call.1} parent=11 // pred_region
          %107 = vsyncadd [#allocation3], 0
          %s109 = sshll.u32 %s0, 4
          %s110 = int_to_ptr.hbm [resolvable:$true] %s109
          %s111 = sshll.u32 [#allocation2], 4
          %s112 = int_to_ptr.vmem [resolvable:$true] %s111
          %114 = dma.hbm_to_vmem [thread:$0]  %s110, 16, %s112, [#allocation3]
        $region16: #{tpu_custom_call.1} parent=11 // pred_fallthru
          _
      $region12: #{tpu_custom_call.1} parent=5 // pred_fallthru
        _
      %p115 = scmp.lt.s32.totalorder %s15, 4
      // Predicated region
      $region17: #{tpu_custom_call.1} parent=5 // pred_check
        %p116 = pneg %p115
      $region18: #{tpu_custom_call.1} parent=5 // pred_check_branch
        %118 = sbr.rel (%p116) target = $region20
      $region19: #{tpu_custom_call.1} parent=5 // pred_region
        // Predicated region
        $region21: #{tpu_custom_call.1} parent=19 // pred_check
          %p119 = pneg %p56
        $region22: #{tpu_custom_call.1} parent=19 // pred_check_branch
          %121 = sbr.rel (%p119) target = $region24
        $region23: #{tpu_custom_call.1} parent=19 // pred_region
          %s122 = sand.u32 %s46, 1
          %s123 = scalar_lea.sflag [#allocation6], %s122
          %s124 = sand.u32 %s46, 1
          %s125 = smul.addr %s124, 16
          %s126 = scalar_lea.vmem [#allocation5], %s125
          %s127 = smul.u32 2, %s15
          %129 = vsyncadd %s123, 0
          %s130 = smul.addr %s127, 8
          %s131 = scalar_lea.hbm %s1, %s130
          %s132 = sshll.u32 %s131, 4
          %s133 = int_to_ptr.hbm [resolvable:$true] %s132
          %s134 = sshll.u32 %s126, 4
          %s135 = int_to_ptr.vmem [resolvable:$true] %s134
          %140 = dma.hbm_to_vmem [thread:$0]  %s133, 256, %s135, %s123, 128, 128, 8
        $region24: #{tpu_custom_call.1} parent=19 // pred_fallthru
          _
      $region20: #{tpu_custom_call.1} parent=5 // pred_fallthru
        _
      %p141 = scmp.le.s32.totalorder 1, %s15
      %p142 = scmp.lt.s32.totalorder %s15, 5
      %p143 = pnand %p141, %p142
      %p144 = pneg %p143
      // Predicated region
      $region25: #{tpu_custom_call.1} parent=5 // pred_check
        _
      $region26: #{tpu_custom_call.1} parent=5 // pred_check_branch
        %146 = sbr.rel (%p143) target = $region28
      $region27: #{tpu_custom_call.1} parent=5 // pred_region
        %s147 = ssub.s32 %s15, 1
        // Predicated region
        $region29: #{tpu_custom_call.1} parent=27 // pred_check
          %p148 = pneg %p36
        $region30: #{tpu_custom_call.1} parent=27 // pred_check_branch
          %150 = sbr.rel (%p148) target = $region32
        $region31: #{tpu_custom_call.1} parent=27 // pred_region
          %152 = dma.done [#allocation3], 16
        $region32: #{tpu_custom_call.1} parent=27 // pred_fallthru
          _
        %s153 = sand.u32 %s49, 1
        %s154 = scalar_lea.sflag [#allocation6], %s153
        %s155 = sand.u32 %s49, 1
        %s156 = smul.addr %s155, 16
        %s157 = scalar_lea.vmem [#allocation5], %s156
        // Predicated region
        $region33: #{tpu_custom_call.1} parent=27 // pred_check
          %p158 = pneg %p62
        $region34: #{tpu_custom_call.1} parent=27 // pred_check_branch
          %160 = sbr.rel (%p158) target = $region36
        $region35: #{tpu_custom_call.1} parent=27 // pred_region
          %162 = dma.done %s154, 256
        $region36: #{tpu_custom_call.1} parent=27 // pred_fallthru
          _
        %p163 = pneg %p36
        %p164 = pneg %p33
        %s165 = sand.u32 %s49, 1
        %s166 = scalar_lea.sflag [#allocation6], %s165
        %s167 = sand.u32 %s49, 1
        %s168 = smul.addr %s167, 16
        %s169 = scalar_lea.vmem [#allocation5], %s168
        %p170 = pneg %p62
        %p171 = pneg %p59
        %p172 = pneg %p88
        %p173 = pneg %p85
        %s174 = sand.u32 %s75, 1
        %s175 = scalar_lea.sflag [#allocation4], %s174
        %s176 = sand.u32 %s75, 1
        %s177 = smul.addr %s176, 16
        %s178 = scalar_lea.vmem [#allocation7], %s177
        %s179 = smul.u32 2, %s20
        %s180 = smul.u32 2, %s20
        %v181 = vld [vmem:[#allocation2] sm:$0x1]
        %v182 = vld [vmem:[%s157] sm:$0xff]
        %v183 = vld [vmem:[%s157 + $0x8] sm:$0xff]
        %v185 = vperm.slane %v181, 0
        %v187 = vmul.f32 %v185, %v182
        %v188 = vmul.f32 %v185, %v183
        %189 = vst [vmem:[%s178] sm:$0xff] %v187
        %190 = vst [vmem:[%s178 + $0x8] sm:$0xff] %v188
        %s191 = sand.u32 %s75, 1
        %s192 = scalar_lea.sflag [#allocation4], %s191
        %s193 = sand.u32 %s75, 1
        %s194 = smul.addr %s193, 16
        %s195 = scalar_lea.vmem [#allocation7], %s194
        // Predicated region
        $region37: #{tpu_custom_call.1} parent=27 // pred_check
          %p196 = pneg %p85
        $region38: #{tpu_custom_call.1} parent=27 // pred_check_branch
          %198 = sbr.rel (%p196) target = $region40
        $region39: #{tpu_custom_call.1} parent=27 // pred_region
          %s199 = smul.u32 2, %s20
          %201 = vsyncadd %s192, 0
          %s202 = smul.addr %s199, 8
          %s203 = scalar_lea.hbm %s2, %s202
          %s204 = sshll.u32 %s195, 4
          %s205 = int_to_ptr.vmem [resolvable:$true] %s204
          %s206 = sshll.u32 %s203, 4
          %s207 = int_to_ptr.hbm [resolvable:$true] %s206
          %212 = dma.vmem_to_hbm [thread:$0]  %s205, 256, %s207, %s192, 128, 128, 8
        $region40: #{tpu_custom_call.1} parent=27 // pred_fallthru
          _
      $region28: #{tpu_custom_call.1} parent=5 // pred_fallthru
        _
      %p213 = scmp.le.s32.totalorder 2, %s15
      // Predicated region
      $region41: #{tpu_custom_call.1} parent=5 // pred_check
        %p214 = pneg %p213
      $region42: #{tpu_custom_call.1} parent=5 // pred_check_branch
        %216 = sbr.rel (%p214) target = $region44
      $region43: #{tpu_custom_call.1} parent=5 // pred_region
        %s217 = ssub.s32 %s15, 2
        // Predicated region
        $region45: #{tpu_custom_call.1} parent=43 // pred_check
          %p218 = pneg %p91
        $region46: #{tpu_custom_call.1} parent=43 // pred_check_branch
          %220 = sbr.rel (%p218) target = $region48
        $region47: #{tpu_custom_call.1} parent=43 // pred_region
          %s221 = sand.u32 %s76, 1
          %s222 = scalar_lea.sflag [#allocation4], %s221
          %s223 = sand.u32 %s76, 1
          %s224 = smul.addr %s223, 16
          %s225 = scalar_lea.vmem [#allocation7], %s224
          %227 = dma.done %s222, 256
        $region48: #{tpu_custom_call.1} parent=43 // pred_fallthru
          _
      $region44: #{tpu_custom_call.1} parent=5 // pred_fallthru
        _
    $region6: #{tpu_custom_call.1} parent=1 // loop_footer
      %s19 = sadd.s32 1, %s15
    $region7: #{tpu_custom_call.1} parent=1 // loop_footer_branch
      %14 = sbr.rel target = $region3
    $region8: #{tpu_custom_call.1} parent=1 // loop_exit
      _
    %228 = vsyncpa [#allocation3], 1
    %s229 = scalar_lea.sflag [#allocation3], 1
    %230 = vsyncpa %s229, 1
    %231 = vsyncpa [#allocation6], 1
    %s232 = scalar_lea.sflag [#allocation6], 1
    %233 = vsyncpa %s232, 1
    %234 = vsyncpa [#allocation4], 1
    %s235 = scalar_lea.sflag [#allocation4], 1
    %236 = vsyncpa %s235, 1

</llo_original>
